<compile_context>
chip_gen: v5e
topology: v5e:2x2
jax: 0.10.0
libtpu: 0.0.40
codegen_flags: <defaults>
</compile_context>

<pallas_src>
import jax
import jax.numpy as jnp
from jax.experimental import pallas as pl
from jax.experimental.pallas import tpu as pltpu


def resblock_kernel(x_ref, xres_ref, wt_ref, b_ref, o_ref, acc_ref):
    # x_ref   : (tm, tk)  row tile of x for the matmul (K-slice k)
    # xres_ref: (tm, tn)  row tile of x for the residual add (N-slice j)
    # wt_ref  : (tk, tn)  pre-transposed weight tile  (y = x @ W^T = x @ wt)
    # b_ref   : (1, tn)   bias slice
    # o_ref   : (tm, tn)  output tile
    # acc_ref : (tm, tn)  f32 accumulator scratch
    k = pl.program_id(2)

    @pl.when(k == 0)
    def _init():
        acc_ref[...] = jnp.zeros_like(acc_ref)

    # MXU matmul in the operands' native dtype, f32 accumulation.
    acc_ref[...] += jnp.dot(x_ref[...], wt_ref[...],
                            preferred_element_type=jnp.float32)

    @pl.when(k == pl.num_programs(2) - 1)
    def _epilogue():
        y = acc_ref[...] + b_ref[...].astype(jnp.float32)
        silu = y * jax.nn.sigmoid(y)          # exp + divide lower to the EUP
        o_ref[...] = (xres_ref[...].astype(jnp.float32) + silu).astype(o_ref.dtype)


def _round_up(n, m):
    return (n + m - 1) // m * m


def _pick_tile(dim, preferred, align):
    """Largest multiple of `align` that divides `dim` and is <= `preferred`.
    Falls back to the full dim (always a legal block) when `dim` is small or
    not a multiple of `align`."""
    if dim <= preferred or dim % align != 0:
        return dim
    t = (preferred // align) * align
    while t > 0:
        if dim % t == 0:
            return t
        t -= align
    return dim


def resblock_forward(x, weight, bias, *, tm=256, tn=512, tk=1024):
    """ResBlock forward: x + SiLU(x @ weight.T + bias).

    x      : (..., H)
    weight : (H, H) in torch nn.Linear (out_features, in_features) layout
    bias   : (H,)
    tm/tn/tk are *preferred* tile sizes; they are shrunk to legal values.
    """
    orig_shape = x.shape
    H = orig_shape[-1]
    x2d = x.reshape(-1, H)
    M = x2d.shape[0]

    # Pre-transpose the weight once (outside the kernel) -> plain matmul.
    wt = jnp.transpose(weight)          # (H_in, H_out)
    b2d = bias.reshape(1, H)

    # Legal tile sizes (lane dims multiple of 128 or full; sublanes mult. of 8).
    tn = _pick_tile(H, tn, 128)
    tk = _pick_tile(H, tk, 128)
    tm = min(tm, _round_up(M, 8))
    m_pad = _round_up(M, tm)
    if m_pad != M:
        x2d = jnp.pad(x2d, ((0, m_pad - M), (0, 0)))

    grid = (m_pad // tm, H // tn, H // tk)

    # Rough VMEM budget (double-buffered streams + accumulator); set an explicit
    # scoped-VMEM limit with headroom, capped for v7x's 64 MiB physical VMEM.
    isz = x2d.dtype.itemsize
    wsz = wt.dtype.itemsize
    est = (2 * (tm * tk + 2 * tm * tn) * isz
           + 2 * tk * tn * wsz
           + 2 * tn * b2d.dtype.itemsize
           + tm * tn * 4)
    vmem_limit = int(min(max(4 * est, 32 * 1024 * 1024), 64 * 1024 * 1024))

    cost = pl.CostEstimate(
        flops=2 * m_pad * H * H,
        transcendentals=m_pad * H,
        bytes_accessed=(2 * m_pad * H * isz            # x (matmul + residual)
                        + grid[0] * H * H * wsz        # streamed weight
                        + H * b2d.dtype.itemsize       # bias
                        + m_pad * H * isz),            # output
    )

    out = pl.pallas_call(
        resblock_kernel,
        out_shape=jax.ShapeDtypeStruct((m_pad, H), x.dtype),
        grid_spec=pltpu.PrefetchScalarGridSpec(
            num_scalar_prefetch=0,
            grid=grid,
            in_specs=[
                pl.BlockSpec((tm, tk), lambda i, j, k: (i, k)),   # x (matmul)
                pl.BlockSpec((tm, tn), lambda i, j, k: (i, j)),   # x (residual)
                pl.BlockSpec((tk, tn), lambda i, j, k: (k, j)),   # W^T tile
                pl.BlockSpec((1, tn), lambda i, j, k: (0, j)),    # bias slice
            ],
            out_specs=pl.BlockSpec((tm, tn), lambda i, j, k: (i, j)),
            scratch_shapes=[pltpu.VMEM((tm, tn), jnp.float32)],
        ),
        compiler_params=pltpu.CompilerParams(
            dimension_semantics=("parallel", "parallel", "arbitrary"),
            vmem_limit_bytes=vmem_limit,
        ),
        cost_estimate=cost,
    )(x2d, x2d, wt, b2d)

    if m_pad != M:
        out = out[:M]
    return out.reshape(orig_shape)


def reference_forward(x, weight, bias):
    y = jnp.einsum("...i,oi->...o", x.astype(jnp.float32),
                   weight.astype(jnp.float32),
                   precision=jax.lax.Precision.HIGHEST) + bias.astype(jnp.float32)
    return (x.astype(jnp.float32) + y * jax.nn.sigmoid(y)).astype(x.dtype)


if __name__ == "__main__":
    key = jax.random.PRNGKey(0)
    k_x, k_b, k_w, k_x2 = jax.random.split(key, 4)

    # Shapes implied by the module: (batch, seq, hidden).
    batch, seq, hidden = 2, 8, 32
    x = jax.random.normal(k_x, (batch, seq, hidden), dtype=jnp.float32)

    # nn.Linear(hidden, hidden): weight zero-initialized per the module's
    # __init__ (torch.nn.init.zeros_); bias uses default U(-1/sqrt(H), 1/sqrt(H)).
    weight = jnp.zeros((hidden, hidden), dtype=jnp.float32)
    bound = 1.0 / (hidden ** 0.5)
    bias = jax.random.uniform(k_b, (hidden,), dtype=jnp.float32,
                              minval=-bound, maxval=bound)

    out = resblock_forward(x, weight, bias)
    out = jax.block_until_ready(out)
    ref = reference_forward(x, weight, bias)
    assert out.shape == x.shape and out.dtype == x.dtype
    assert jnp.allclose(out, ref, atol=1e-5, rtol=1e-5)

    # Secondary check: non-zero weight and a shape exercising the tiled path
    # (row padding, K accumulation, N tiling, multi-step parallel M axis).
    b2, s2, h2 = 2, 56, 256
    x2 = jax.random.normal(k_x2, (b2, s2, h2), dtype=jnp.float32)
    w2 = jax.random.normal(k_w, (h2, h2), dtype=jnp.float32) * 0.05
    bias2 = jax.random.uniform(k_b, (h2,), dtype=jnp.float32,
                               minval=-0.1, maxval=0.1)
    out2 = jax.block_until_ready(
        resblock_forward(x2, w2, bias2, tm=64, tn=128, tk=128))
    ref2 = reference_forward(x2, w2, bias2)
    assert jnp.allclose(out2, ref2, atol=1e-2, rtol=1e-2)

    print("KERNEL_OK")
</pallas_src>

<mosaic_0001>
module attributes {stable_mosaic.version = 11 : i64} {
  func.func @resblock_kernel(%arg0: i32, %arg1: i32, %arg2: i32, %arg3: memref<16x32xf32, #tpu.memory_space<vmem>>, %arg4: memref<16x32xf32, #tpu.memory_space<vmem>>, %arg5: memref<32x32xf32, #tpu.memory_space<vmem>>, %arg6: memref<1x32xf32, #tpu.memory_space<vmem>>, %arg7: memref<16x32xf32, #tpu.memory_space<vmem>>, %arg8: memref<16x32xf32, #tpu.memory_space<vmem>>) attributes {dimension_semantics = [#tpu.dimension_semantics<parallel>, #tpu.dimension_semantics<parallel>, #tpu.dimension_semantics<arbitrary>], iteration_bounds = array<i64: 1, 1, 1>, scalar_prefetch = 0 : i64, scratch_operands = 1 : i64, tpu.core_type = #tpu.core_type<tc>, window_params = [{transform_indices = @transform_0, window_bounds = array<i64: 16, 32>}, {transform_indices = @transform_1, window_bounds = array<i64: 16, 32>}, {transform_indices = @transform_2, window_bounds = array<i64: 32, 32>}, {transform_indices = @transform_3, window_bounds = array<i64: 1, 32>}, {transform_indices = @transform_4, window_bounds = array<i64: 16, 32>}]} {
    %c0_i32 = arith.constant 0 : i32
    %0 = arith.cmpi eq, %arg2, %c0_i32 : i32
    %1 = arith.extui %0 : i1 to i32
    %c0_i32_0 = arith.constant 0 : i32
    %2 = arith.cmpi ne, %1, %c0_i32_0 : i32
    scf.if %2 {
      %cst_10 = arith.constant 0.000000e+00 : f32
      %12 = vector.broadcast %cst_10 : f32 to vector<16x32xf32>
      %c0_11 = arith.constant 0 : index
      %c0_12 = arith.constant 0 : index
      %13 = vector.load %arg8[%c0_11, %c0_12] : memref<16x32xf32, #tpu.memory_space<vmem>>, vector<16x32xf32>
      tpu.vector_store %arg8[%c0_11, %c0_12], %12 {strides = array<i32>} : memref<16x32xf32, #tpu.memory_space<vmem>>, vector<16x32xf32>,
    } else {
    }
    %c0 = arith.constant 0 : index
    %c0_1 = arith.constant 0 : index
    %3 = vector.load %arg8[%c0, %c0_1] : memref<16x32xf32, #tpu.memory_space<vmem>>, vector<16x32xf32>
    %c0_2 = arith.constant 0 : index
    %c0_3 = arith.constant 0 : index
    %4 = vector.load %arg3[%c0_2, %c0_3] : memref<16x32xf32, #tpu.memory_space<vmem>>, vector<16x32xf32>
    %c0_4 = arith.constant 0 : index
    %c0_5 = arith.constant 0 : index
    %5 = vector.load %arg5[%c0_4, %c0_5] : memref<32x32xf32, #tpu.memory_space<vmem>>, vector<32x32xf32>
    %cst = arith.constant dense<0.000000e+00> : vector<16x32xf32>
    %6 = tpu.matmul %4, %5, %cst {dimension_numbers = #tpu.dot_dimension_numbers<[1], [0], [0], [1], [0, 0, 1, 1], [], []>} : vector<16x32xf32>, vector<32x32xf32>, vector<16x32xf32> -> vector<16x32xf32>
    %7 = arith.addf %3, %6 : vector<16x32xf32>
    %c0_6 = arith.constant 0 : index
    %c0_7 = arith.constant 0 : index
    %8 = vector.load %arg8[%c0_6, %c0_7] : memref<16x32xf32, #tpu.memory_space<vmem>>, vector<16x32xf32>
    tpu.vector_store %arg8[%c0_6, %c0_7], %7 {strides = array<i32>} : memref<16x32xf32, #tpu.memory_space<vmem>>, vector<16x32xf32>,
    %c0_i32_8 = arith.constant 0 : i32
    %9 = arith.cmpi eq, %arg2, %c0_i32_8 : i32
    %10 = arith.extui %9 : i1 to i32
    %c0_i32_9 = arith.constant 0 : i32
    %11 = arith.cmpi ne, %10, %c0_i32_9 : i32
    scf.if %11 {
      %c0_10 = arith.constant 0 : index
      %c0_11 = arith.constant 0 : index
      %12 = vector.load %arg8[%c0_10, %c0_11] : memref<16x32xf32, #tpu.memory_space<vmem>>, vector<16x32xf32>
      %c0_12 = arith.constant 0 : index
      %c0_13 = arith.constant 0 : index
      %13 = vector.load %arg6[%c0_12, %c0_13] : memref<1x32xf32, #tpu.memory_space<vmem>>, vector<1x32xf32>
      %14 = vector.broadcast %13 : vector<1x32xf32> to vector<16x32xf32>
      %15 = arith.addf %12, %14 : vector<16x32xf32>
      %16 = arith.negf %15 : vector<16x32xf32>
      %17 = math.exp %16 : vector<16x32xf32>
      %cst_14 = arith.constant 1.000000e+00 : f32
      %18 = vector.broadcast %cst_14 : f32 to vector<16x32xf32>
      %19 = arith.addf %18, %17 : vector<16x32xf32>
      %20 = arith.divf %18, %19 : vector<16x32xf32>
      %21 = arith.mulf %15, %20 : vector<16x32xf32>
      %c0_15 = arith.constant 0 : index
      %c0_16 = arith.constant 0 : index
      %22 = vector.load %arg4[%c0_15, %c0_16] : memref<16x32xf32, #tpu.memory_space<vmem>>, vector<16x32xf32>
      %23 = arith.addf %22, %21 : vector<16x32xf32>
      %c0_17 = arith.constant 0 : index
      %c0_18 = arith.constant 0 : index
      %24 = vector.load %arg7[%c0_17, %c0_18] : memref<16x32xf32, #tpu.memory_space<vmem>>, vector<16x32xf32>
      tpu.vector_store %arg7[%c0_17, %c0_18], %23 {strides = array<i32>} : memref<16x32xf32, #tpu.memory_space<vmem>>, vector<16x32xf32>,
    } else {
    }
    return
  }
  func.func @transform_0(%arg0: i32, %arg1: i32, %arg2: i32) -> (i32, i32) {
    %c0_i32 = arith.constant 0 : i32
    return %arg0, %arg2 : i32, i32
  }
  func.func @transform_1(%arg0: i32, %arg1: i32, %arg2: i32) -> (i32, i32) {
    %c0_i32 = arith.constant 0 : i32
    return %arg0, %arg1 : i32, i32
  }
  func.func @transform_2(%arg0: i32, %arg1: i32, %arg2: i32) -> (i32, i32) {
    %c0_i32 = arith.constant 0 : i32
    return %arg2, %arg1 : i32, i32
  }
  func.func @transform_3(%arg0: i32, %arg1: i32, %arg2: i32) -> (i32, i32) {
    %c0_i32 = arith.constant 0 : i32
    %c0_i32_0 = arith.constant 0 : i32
    return %c0_i32, %arg1 : i32, i32
  }
  func.func @transform_4(%arg0: i32, %arg1: i32, %arg2: i32) -> (i32, i32) {
    %c0_i32 = arith.constant 0 : i32
    return %arg0, %arg1 : i32, i32
  }
}

</mosaic_0001>

<llo_original>
// kernel: tpu_custom_call.1
$region0: #{tpu_custom_call.1}
  #allocation0 [shape = 'u32[]', space=smem, size = 0x4, offset = 0x4, fixed_abs, tag = 'smem constant byte address 0x4 - core index']
  #allocation1 [shape = 'u32[72,128]{1,0:T(1,128)}', space=vmem, size = 0x9000, scoped, tag = 'internal scratch']
  #allocation2 [shape = 'f32[16,32]{1,0:T(8,128)}', space=vmem, size = 0x2000, scoped, tag = 'scratch operand']
  %s0 = inlined_call_operand.hbm [shape: f32[16,32], index: 0, kind: input, shape index: {}]
  %s1 = inlined_call_operand.hbm [shape: f32[16,32], index: 1, kind: input, shape index: {}]
  %s2 = inlined_call_operand.hbm [shape: f32[32,32], index: 2, kind: input, shape index: {}]
  %s3 = inlined_call_operand.vmem [shape: f32[1,32], index: 3, kind: input, shape index: {}]
  %s4 = inlined_call_operand.hbm [shape: f32[16,32], index: 4, kind: output, shape index: {}]
  %s5 = sld [smem:[#allocation0]]
  $region46: #{tpu_custom_call.1} parent=0
    _
  %s7 = ssub.s32 1, %s5
  %s8 = scalar_select 0, %s7, %s5
  $region1: #{tpu_custom_call.1} parent=0
    #allocation3 [shape = 'u8[8192]{0}', space=vmem, size = 0x2000, scoped, tag = 'input window, operand 0, single buffered']
    #allocation4 [shape = 's32[1]{0}', space=sflag, size = 0x4, scoped, tag = 'scoped memory for tpu_custom_call.1']
    #allocation5 [shape = 's32[1]{0}', space=sflag, size = 0x4, scoped, tag = 'scoped memory for tpu_custom_call.1']
    #allocation6 [shape = 'u8[8192]{0}', space=vmem, size = 0x2000, scoped, tag = 'input window, operand 1, single buffered']
    #allocation7 [shape = 's32[1]{0}', space=sflag, size = 0x4, scoped, tag = 'scoped memory for tpu_custom_call.1']
    #allocation8 [shape = 'u8[16384]{0}', space=vmem, size = 0x4000, scoped, tag = 'input window, operand 2, single buffered']
    #allocation9 [shape = 'u8[8192]{0}', space=vmem, size = 0x2000, scoped, tag = 'output window, operand 0, single buffered']
    %9 = vsyncpa [#allocation4], 0
    %10 = vsyncpa [#allocation7], 0
    %11 = vsyncpa [#allocation5], 0
    // Predicated region
    $region2: #{tpu_custom_call.1} parent=1 // pred_check
      _
    $region3: #{tpu_custom_call.1} parent=1 // pred_check_branch
      %13 = sbr.rel (0) target = $region5
    $region4: #{tpu_custom_call.1} parent=1 // pred_region
      %15 = vsyncadd [#allocation4], 0
      %s16 = sshll.u32 %s0, 4
      %s17 = int_to_ptr.hbm [resolvable:$true] %s16
      %s18 = sshll.u32 [#allocation3], 4
      %s19 = int_to_ptr.vmem [resolvable:$true] %s18
      %24 = dma.hbm_to_vmem [thread:$0]  %s17, 256, %s19, [#allocation4], 128, 128, 8
    $region5: #{tpu_custom_call.1} parent=1 // pred_fallthru
      _
    // Predicated region
    $region6: #{tpu_custom_call.1} parent=1 // pred_check
      _
    $region7: #{tpu_custom_call.1} parent=1 // pred_check_branch
      %26 = sbr.rel (0) target = $region9
    $region8: #{tpu_custom_call.1} parent=1 // pred_region
      %28 = vsyncadd [#allocation7], 0
      %s29 = sshll.u32 %s1, 4
      %s30 = int_to_ptr.hbm [resolvable:$true] %s29
      %s31 = sshll.u32 [#allocation6], 4
      %s32 = int_to_ptr.vmem [resolvable:$true] %s31
      %37 = dma.hbm_to_vmem [thread:$0]  %s30, 256, %s32, [#allocation7], 128, 128, 8
    $region9: #{tpu_custom_call.1} parent=1 // pred_fallthru
      _
    // Predicated region
    $region10: #{tpu_custom_call.1} parent=1 // pred_check
      _
    $region11: #{tpu_custom_call.1} parent=1 // pred_check_branch
      %39 = sbr.rel (0) target = $region13
    $region12: #{tpu_custom_call.1} parent=1 // pred_region
      %41 = vsyncadd [#allocation7], 0
      %s42 = sshll.u32 %s2, 4
      %s43 = int_to_ptr.hbm [resolvable:$true] %s42
      %s44 = sshll.u32 [#allocation8], 4
      %s45 = int_to_ptr.vmem [resolvable:$true] %s44
      %50 = dma.hbm_to_vmem [thread:$0]  %s43, 512, %s45, [#allocation7], 128, 128, 8
    $region13: #{tpu_custom_call.1} parent=1 // pred_fallthru
      _
    // Predicated region
    $region14: #{tpu_custom_call.1} parent=1 // pred_check
      _
    $region15: #{tpu_custom_call.1} parent=1 // pred_check_branch
      %52 = sbr.rel (0) target = $region17
    $region16: #{tpu_custom_call.1} parent=1 // pred_region
      _
    $region17: #{tpu_custom_call.1} parent=1 // pred_fallthru
      _
    // Predicated region
    $region18: #{tpu_custom_call.1} parent=1 // pred_check
      _
    $region19: #{tpu_custom_call.1} parent=1 // pred_check_branch
      %54 = sbr.rel (0) target = $region21
    $region20: #{tpu_custom_call.1} parent=1 // pred_region
      %56 = dma.done [#allocation4], 256
    $region21: #{tpu_custom_call.1} parent=1 // pred_fallthru
      _
    // Predicated region
    $region22: #{tpu_custom_call.1} parent=1 // pred_check
      _
    $region23: #{tpu_custom_call.1} parent=1 // pred_check_branch
      %58 = sbr.rel (0) target = $region25
    $region24: #{tpu_custom_call.1} parent=1 // pred_region
      %60 = dma.done [#allocation7], 256
    $region25: #{tpu_custom_call.1} parent=1 // pred_fallthru
      _
    // Predicated region
    $region26: #{tpu_custom_call.1} parent=1 // pred_check
      _
    $region27: #{tpu_custom_call.1} parent=1 // pred_check_branch
      %62 = sbr.rel (0) target = $region29
    $region28: #{tpu_custom_call.1} parent=1 // pred_region
      %64 = dma.done [#allocation7], 512
    $region29: #{tpu_custom_call.1} parent=1 // pred_fallthru
      _
    %p65 = scmp.eq.s32.totalorder 0, 0
    // Predicated region
    $region30: #{tpu_custom_call.1} parent=1 // pred_check
      %p66 = pneg %p65
    $region31: #{tpu_custom_call.1} parent=1 // pred_check_branch
      %68 = sbr.rel (%p66) target = $region33
    $region32: #{tpu_custom_call.1} parent=1 // pred_region
      %vm69 = vcmask 261120
      %70 = vst.msk [vmem:[#allocation2] sm:$0xff] %vm69, 0.0
      %71 = vst.msk [vmem:[#allocation2 + $0x8] sm:$0xff] %vm69, 0.0
    $region33: #{tpu_custom_call.1} parent=1 // pred_fallthru
      _
    %v72 = vld [vmem:[#allocation2] sm:$0xff]
    %v73 = vld [vmem:[#allocation2 + $0x8] sm:$0xff]
    %v74 = vld [vmem:[#allocation3] sm:$0xff]
    %v75 = vld [vmem:[#allocation3 + $0x8] sm:$0xff]
    %v76 = vld [vmem:[#allocation8] sm:$0xff]
    %v77 = vld [vmem:[#allocation8 + $0x8] sm:$0xff]
    %v78 = vld [vmem:[#allocation8 + $0x10] sm:$0xff]
    %v79 = vld [vmem:[#allocation8 + $0x18] sm:$0xff]
    %vm80 = vcmask 261120
    %v82 = vsel %vm80, %v74, 0
    %v85 = vsel %vm80, %v75, 0
    %87 = vmatpush.msra.mxu0 0.0
    %88 = vmatpush.msra.mxu0 0.0
    %89 = vmatpush.msra.mxu0 0.0
    %90 = vmatpush.msra.mxu0 0.0
    %91 = vmatpush.msra.mxu0 0.0
    %92 = vmatpush.msra.mxu0 0.0
    %93 = vmatpush.msra.mxu0 0.0
    %94 = vmatpush.msra.mxu0 0.0
    %95 = vmatpush.msra.mxu0 0.0
    %96 = vmatpush.msra.mxu0 0.0
    %97 = vmatpush.msra.mxu0 0.0
    %98 = vmatpush.msra.mxu0 0.0
    %99 = vmatpush.msra.mxu0 %v79
    %100 = vmatpush.msra.mxu0 %v78
    %101 = vmatpush.msra.mxu0 %v77
    %102 = vmatpush.msra.mxu0 %v76
    %103 = vmatmul.f32.gmra.mxu0 %v82
    %v104 = vpop.f32.mrf.mxu0
    %v105 = vadd.f32 0.0, %v104
    %106 = vmatmul.f32.gmra.mxu0 %v85
    %v107 = vpop.f32.mrf.mxu0
    %v108 = vadd.f32 0.0, %v107
    %109 = vdwg.mxu0
    %v110 = vadd.f32 %v72, %v105
    %v111 = vadd.f32 %v73, %v108
    %112 = vst.msk [vmem:[#allocation2] sm:$0xff] %vm80, %v110
    %113 = vst.msk [vmem:[#allocation2 + $0x8] sm:$0xff] %vm80, %v111
    // Predicated region
    $region34: #{tpu_custom_call.1} parent=1 // pred_check
      %p114 = pneg %p65
    $region35: #{tpu_custom_call.1} parent=1 // pred_check_branch
      %116 = sbr.rel (%p114) target = $region37
    $region36: #{tpu_custom_call.1} parent=1 // pred_region
      %v117 = vld [vmem:[#allocation2] sm:$0xff]
      %v118 = vld [vmem:[#allocation2 + $0x8] sm:$0xff]
      %v119 = vld [vmem:[%s3] sm:$0x1]
      %v121 = vperm.slane %v119, 0
      %v123 = vadd.f32 %v117, %v121
      %v124 = vadd.f32 %v118, %v121
      %v125 = vxor.u32 %v123, 2147483648
      %v126 = vxor.u32 %v124, 2147483648
      %v127 = vmul.f32 %v125, 1.442695
      %v128 = vpow.pop %v127
      %v129 = vmul.f32 %v126, 1.442695
      %v130 = vpow.pop %v129
      %v131 = vadd.f32 %v128, 1.0
      %v132 = vadd.f32 %v130, 1.0
      %v133 = vrcp.pop %v131
      %v134 = vmul.f32 %v131, %v133
      %v135 = vsub.f32 1.0, %v134
      %v136 = vmul.f32 %v133, %v135
      %v137 = vadd.f32 %v133, %v136
      %vm138 = vweird.f32 %v131
      %vm139 = vweird.f32 %v133
      %vm140 = vmor %vm138, %vm139
      %v141 = vsel %vm140, %v133, %v137
      %v142 = vand.u32 2147483647, %v131
      %vm143 = vcmp.eq.f32.partialorder %v142, 8.507059e+37
      %v144 = vand.u32 %v131, 2147483648
      %v145 = vor.u32 1.1754944e-38, %v144
      %v146 = vsel %vm143, %v145, %v141
      %v147 = vmul.f32 1.0, %v146
      %v148 = vrcp.pop %v132
      %v149 = vmul.f32 %v132, %v148
      %v150 = vsub.f32 1.0, %v149
      %v151 = vmul.f32 %v148, %v150
      %v152 = vadd.f32 %v148, %v151
      %vm153 = vweird.f32 %v132
      %vm154 = vweird.f32 %v148
      %vm155 = vmor %vm153, %vm154
      %v156 = vsel %vm155, %v148, %v152
      %v157 = vand.u32 2147483647, %v132
      %vm158 = vcmp.eq.f32.partialorder %v157, 8.507059e+37
      %v159 = vand.u32 %v132, 2147483648
      %v160 = vor.u32 1.1754944e-38, %v159
      %v161 = vsel %vm158, %v160, %v156
      %v162 = vmul.f32 1.0, %v161
      %v163 = vmul.f32 %v123, %v147
      %v164 = vmul.f32 %v124, %v162
      %v165 = vld [vmem:[#allocation6] sm:$0xff]
      %v166 = vld [vmem:[#allocation6 + $0x8] sm:$0xff]
      %v167 = vadd.f32 %v165, %v163
      %v168 = vadd.f32 %v166, %v164
      %169 = vst.msk [vmem:[#allocation9] sm:$0xff] %vm80, %v167
      %170 = vst.msk [vmem:[#allocation9 + $0x8] sm:$0xff] %vm80, %v168
    $region37: #{tpu_custom_call.1} parent=1 // pred_fallthru
      _
    // Predicated region
    $region38: #{tpu_custom_call.1} parent=1 // pred_check
      _
    $region39: #{tpu_custom_call.1} parent=1 // pred_check_branch
      %172 = sbr.rel (0) target = $region41
    $region40: #{tpu_custom_call.1} parent=1 // pred_region
      %174 = vsyncadd [#allocation5], 0
      %s175 = sshll.u32 [#allocation9], 4
      %s176 = int_to_ptr.vmem [resolvable:$true] %s175
      %s177 = sshll.u32 %s4, 4
      %s178 = int_to_ptr.hbm [resolvable:$true] %s177
      %183 = dma.vmem_to_hbm [thread:$0]  %s176, 256, %s178, [#allocation5], 128, 128, 8
    $region41: #{tpu_custom_call.1} parent=1 // pred_fallthru
      _
    // Predicated region
    $region42: #{tpu_custom_call.1} parent=1 // pred_check
      _
    $region43: #{tpu_custom_call.1} parent=1 // pred_check_branch
      %185 = sbr.rel (0) target = $region45
    $region44: #{tpu_custom_call.1} parent=1 // pred_region
      %187 = dma.done [#allocation5], 256
    $region45: #{tpu_custom_call.1} parent=1 // pred_fallthru
      _
    %188 = vsyncpa [#allocation4], 1
    %189 = vsyncpa [#allocation7], 1
    %190 = vsyncpa [#allocation5], 1

</llo_original>
